<compile_context>
chip_gen: v7x
topology: tpu7x:2x2x1
jax: 0.10.0
libtpu: 0.0.40
codegen_flags: <defaults>
</compile_context>

<pallas_src>
import jax
import jax.numpy as jnp
from jax.experimental import pallas as pl
from jax.experimental.pallas import tpu as pltpu


LANE = 128            # TPU lane width: pad weight/bias feature dims to this
MAX_BATCH_TILE = 512  # upper bound on batch-tile rows (multiple of 16 for bf16 sublanes)


def _round_up(x, m):
    return (x + m - 1) // m * m


def _batch_tiling(B):
    """Pick (batch_tile, padded_batch).

    batch_tile is a multiple of 16, padded_batch a multiple of batch_tile.
    Small batches -> one tile; 256..512 rows -> two tiles (both v7x TensorCores busy);
    larger -> 512-row tiles.
    """
    Bp = _round_up(max(B, 16), 16)
    if Bp <= MAX_BATCH_TILE:
        if Bp >= 256 and (Bp // 2) % 16 == 0:
            return Bp // 2, Bp          # 2 independent tiles for the megacore axis
        return Bp, Bp                   # single tile, minimal padding/overhead
    return MAX_BATCH_TILE, _round_up(B, MAX_BATCH_TILE)


def mm_fusion_kernel(x0_ref, x1_ref, w0_ref, w1_ref, benc_ref, wc_ref, bc_ref, out_ref):
    # Cast activations to bf16 in-register (MXU-native operand); accumulate in f32.
    x0 = x0_ref[...].astype(jnp.bfloat16)
    x1 = x1_ref[...].astype(jnp.bfloat16)
    # Fused encoders: two dots into ONE f32 accumulator.  W0p fills cols [:H], W1p fills
    # cols [H:2H], so `e` is exactly the concat-fusion of the two pre-activations.
    e = jnp.dot(x0, w0_ref[...], preferred_element_type=jnp.float32)
    e = e + jnp.dot(x1, w1_ref[...], preferred_element_type=jnp.float32)
    e = jnp.maximum(e + benc_ref[...], 0.0)                     # bias + ReLU in f32
    # concat-fusion + classifier == single [tile,2H] @ [2H,C] matmul (weights pre-packed).
    out = jnp.dot(e.astype(wc_ref.dtype), wc_ref[...],
                  preferred_element_type=jnp.float32)
    out_ref[...] = (out + bc_ref[...]).astype(out_ref.dtype)    # bf16 writeback


def init_params(key, d0, d1, h, c):
    """Logical module parameters (same parametrization as the nn.Linear layers)."""
    ks = jax.random.split(key, 6)
    return {
        "w0": jax.random.normal(ks[0], (d0, h), jnp.float32) * 0.1,
        "b0": jax.random.normal(ks[1], (h,), jnp.float32) * 0.1,
        "w1": jax.random.normal(ks[2], (d1, h), jnp.float32) * 0.1,
        "b1": jax.random.normal(ks[3], (h,), jnp.float32) * 0.1,
        "wc": jax.random.normal(ks[4], (2 * h, c), jnp.float32) * 0.1,
        "bc": jax.random.normal(ks[5], (c,), jnp.float32) * 0.1,
    }


def pack_params(p, lane=LANE):
    """Build padded bf16 weight slabs once (host-side).

    Only the weight/bias FEATURE dims are lane-padded (to 128).  The contraction dims of
    the encoder weights keep their natural widths D0 / D1 so the activation inputs never
    need host-side padding or concatenation.
    """
    d0, h = p["w0"].shape
    d1 = p["w1"].shape[0]
    c = p["bc"].shape[-1]
    hp = _round_up(2 * h, lane)         # padded hidden dim (2H -> 128)
    cp = _round_up(c, lane)             # padded class dim  (C  -> 128), lane-dense out

    w0p = jnp.zeros((d0, hp), jnp.float32).at[:, :h].set(p["w0"])
    w1p = jnp.zeros((d1, hp), jnp.float32).at[:, h:2 * h].set(p["w1"])

    benc = jnp.zeros((1, hp), jnp.float32)
    benc = benc.at[0, :h].set(p["b0"]).at[0, h:2 * h].set(p["b1"])

    wc = jnp.zeros((hp, cp), jnp.float32).at[:2 * h, :c].set(p["wc"])
    bc = jnp.zeros((1, cp), jnp.float32).at[0, :c].set(p["bc"])

    return {
        "w0": w0p.astype(jnp.bfloat16),   # bf16 MXU operands
        "w1": w1p.astype(jnp.bfloat16),
        "wc": wc.astype(jnp.bfloat16),
        "benc": benc,                     # biases stay f32
        "bc": bc,
        "num_classes": c,
    }


def mm_fusion_forward(x0, x1, packed):
    B, D0 = x0.shape
    D1 = x1.shape[1]
    Hp = packed["w0"].shape[1]
    Cp = packed["wc"].shape[1]
    C = packed["num_classes"]

    tile, Bp = _batch_tiling(B)
    if Bp != B:
        # Only the batch dim is padded (and only when B is not already a tile multiple);
        # feature dims go into the kernel at their natural width.
        x0 = jnp.pad(x0, ((0, Bp - B), (0, 0)))
        x1 = jnp.pad(x1, ((0, Bp - B), (0, 0)))

    grid = (Bp // tile,)
    flops = 2 * Bp * (D0 + D1) * Hp + 2 * Bp * Hp * Cp
    bytes_accessed = (
        Bp * (D0 + D1) * 4                                            # f32 activations
        + (packed["w0"].size + packed["w1"].size + packed["wc"].size) * 2
        + (packed["benc"].size + packed["bc"].size) * 4
        + Bp * Cp * 2                                                 # bf16 writeback
    )

    out_padded = pl.pallas_call(
        mm_fusion_kernel,
        out_shape=jax.ShapeDtypeStruct((Bp, Cp), jnp.bfloat16),
        grid_spec=pltpu.PrefetchScalarGridSpec(
            num_scalar_prefetch=0,
            grid=grid,
            in_specs=[
                pl.BlockSpec((tile, D0), lambda i: (i, 0)),   # x0: one batch tile / step
                pl.BlockSpec((tile, D1), lambda i: (i, 0)),   # x1: one batch tile / step
                pl.BlockSpec((D0, Hp), lambda i: (0, 0)),     # weights: VMEM-resident
                pl.BlockSpec((D1, Hp), lambda i: (0, 0)),
                pl.BlockSpec((1, Hp), lambda i: (0, 0)),
                pl.BlockSpec((Hp, Cp), lambda i: (0, 0)),
                pl.BlockSpec((1, Cp), lambda i: (0, 0)),
            ],
            out_specs=pl.BlockSpec((tile, Cp), lambda i: (i, 0)),
        ),
        compiler_params=pltpu.CompilerParams(
            # batch tiles are independent -> megacore-shardable on v7x
            dimension_semantics=("parallel",),
        ),
        cost_estimate=pl.CostEstimate(
            flops=flops, transcendentals=0, bytes_accessed=bytes_accessed),
    )(x0, x1, packed["w0"], packed["w1"], packed["benc"], packed["wc"], packed["bc"])

    # Strip batch / class padding; return f32 logits like the reference module.
    return out_padded[:B, :C].astype(jnp.float32)


def _reference(x0, x1, p):
    e0 = jnp.maximum(x0 @ p["w0"] + p["b0"], 0.0)
    e1 = jnp.maximum(x1 @ p["w1"] + p["b1"], 0.0)
    fused = jnp.concatenate([e0, e1], axis=-1)
    return fused @ p["wc"] + p["bc"]


if __name__ == "__main__":
    key = jax.random.PRNGKey(0)
    B, D0, D1, H, C = 8, 32, 16, 32, 8

    kx0, kx1, kp = jax.random.split(key, 3)
    x0 = jax.random.normal(kx0, (B, D0), jnp.float32)   # modality 0
    x1 = jax.random.normal(kx1, (B, D1), jnp.float32)   # modality 1
    params = init_params(kp, D0, D1, H, C)
    packed = pack_params(params)

    out = mm_fusion_forward(x0, x1, packed)
    out = jax.block_until_ready(out)

    ref = _reference(x0, x1, params)
    assert out.shape == (B, C)
    # bf16 MXU operands / bf16 output with f32 accumulation -> loosened tolerance.
    assert jnp.allclose(out, ref, atol=2e-2, rtol=2e-2), "mismatch vs reference"

    print("KERNEL_OK")
</pallas_src>

<mosaic_0001>
module attributes {stable_mosaic.version = 11 : i64} {
  func.func @mm_fusion_kernel(%arg0: i32, %arg1: memref<16x32xf32, #tpu.memory_space<vmem>>, %arg2: memref<16x16xf32, #tpu.memory_space<vmem>>, %arg3: memref<32x128xbf16, #tpu.memory_space<vmem>>, %arg4: memref<16x128xbf16, #tpu.memory_space<vmem>>, %arg5: memref<1x128xf32, #tpu.memory_space<vmem>>, %arg6: memref<128x128xbf16, #tpu.memory_space<vmem>>, %arg7: memref<1x128xf32, #tpu.memory_space<vmem>>, %arg8: memref<16x128xbf16, #tpu.memory_space<vmem>>) attributes {dimension_semantics = [#tpu.dimension_semantics<parallel>], iteration_bounds = array<i64: 1>, scalar_prefetch = 0 : i64, scratch_operands = 0 : i64, tpu.core_type = #tpu.core_type<tc>, window_params = [{transform_indices = @transform_0, window_bounds = array<i64: 16, 32>}, {transform_indices = @transform_1, window_bounds = array<i64: 16, 16>}, {pipeline_mode = #tpu.pipeline_mode<synchronous>, transform_indices = @transform_2, window_bounds = array<i64: 32, 128>}, {pipeline_mode = #tpu.pipeline_mode<synchronous>, transform_indices = @transform_3, window_bounds = array<i64: 16, 128>}, {pipeline_mode = #tpu.pipeline_mode<synchronous>, transform_indices = @transform_4, window_bounds = array<i64: 1, 128>}, {pipeline_mode = #tpu.pipeline_mode<synchronous>, transform_indices = @transform_5, window_bounds = array<i64: 128, 128>}, {pipeline_mode = #tpu.pipeline_mode<synchronous>, transform_indices = @transform_6, window_bounds = array<i64: 1, 128>}, {transform_indices = @transform_7, window_bounds = array<i64: 16, 128>}]} {
    %c0 = arith.constant 0 : index
    %c0_0 = arith.constant 0 : index
    %0 = vector.load %arg1[%c0, %c0_0] : memref<16x32xf32, #tpu.memory_space<vmem>>, vector<16x32xf32>
    %1 = arith.truncf %0 : vector<16x32xf32> to vector<16x32xbf16>
    %c0_1 = arith.constant 0 : index
    %c0_2 = arith.constant 0 : index
    %2 = vector.load %arg2[%c0_1, %c0_2] : memref<16x16xf32, #tpu.memory_space<vmem>>, vector<16x16xf32>
    %3 = arith.truncf %2 : vector<16x16xf32> to vector<16x16xbf16>
    %c0_3 = arith.constant 0 : index
    %c0_4 = arith.constant 0 : index
    %4 = vector.load %arg3[%c0_3, %c0_4] : memref<32x128xbf16, #tpu.memory_space<vmem>>, vector<32x128xbf16>
    %cst = arith.constant dense<0.000000e+00> : vector<16x128xf32>
    %5 = tpu.matmul %1, %4, %cst {dimension_numbers = #tpu.dot_dimension_numbers<[1], [0], [0], [1], [0, 0, 1, 1], [], []>} : vector<16x32xbf16>, vector<32x128xbf16>, vector<16x128xf32> -> vector<16x128xf32>
    %c0_5 = arith.constant 0 : index
    %c0_6 = arith.constant 0 : index
    %6 = vector.load %arg4[%c0_5, %c0_6] : memref<16x128xbf16, #tpu.memory_space<vmem>>, vector<16x128xbf16>
    %cst_7 = arith.constant dense<0.000000e+00> : vector<16x128xf32>
    %7 = tpu.matmul %3, %6, %cst_7 {dimension_numbers = #tpu.dot_dimension_numbers<[1], [0], [0], [1], [0, 0, 1, 1], [], []>} : vector<16x16xbf16>, vector<16x128xbf16>, vector<16x128xf32> -> vector<16x128xf32>
    %8 = arith.addf %5, %7 : vector<16x128xf32>
    %c0_8 = arith.constant 0 : index
    %c0_9 = arith.constant 0 : index
    %9 = vector.load %arg5[%c0_8, %c0_9] : memref<1x128xf32, #tpu.memory_space<vmem>>, vector<1x128xf32>
    %10 = vector.broadcast %9 : vector<1x128xf32> to vector<16x128xf32>
    %11 = arith.addf %8, %10 : vector<16x128xf32>
    %cst_10 = arith.constant 0.000000e+00 : f32
    %12 = vector.broadcast %cst_10 : f32 to vector<16x128xf32>
    %13 = arith.maximumf %11, %12 : vector<16x128xf32>
    %14 = arith.truncf %13 : vector<16x128xf32> to vector<16x128xbf16>
    %c0_11 = arith.constant 0 : index
    %c0_12 = arith.constant 0 : index
    %15 = vector.load %arg6[%c0_11, %c0_12] : memref<128x128xbf16, #tpu.memory_space<vmem>>, vector<128x128xbf16>
    %cst_13 = arith.constant dense<0.000000e+00> : vector<16x128xf32>
    %16 = tpu.matmul %14, %15, %cst_13 {dimension_numbers = #tpu.dot_dimension_numbers<[1], [0], [0], [1], [0, 0, 1, 1], [], []>} : vector<16x128xbf16>, vector<128x128xbf16>, vector<16x128xf32> -> vector<16x128xf32>
    %c0_14 = arith.constant 0 : index
    %c0_15 = arith.constant 0 : index
    %17 = vector.load %arg7[%c0_14, %c0_15] : memref<1x128xf32, #tpu.memory_space<vmem>>, vector<1x128xf32>
    %18 = vector.broadcast %17 : vector<1x128xf32> to vector<16x128xf32>
    %19 = arith.addf %16, %18 : vector<16x128xf32>
    %20 = arith.truncf %19 : vector<16x128xf32> to vector<16x128xbf16>
    %c0_16 = arith.constant 0 : index
    %c0_17 = arith.constant 0 : index
    %21 = vector.load %arg8[%c0_16, %c0_17] : memref<16x128xbf16, #tpu.memory_space<vmem>>, vector<16x128xbf16>
    tpu.vector_store %arg8[%c0_16, %c0_17], %20 {strides = array<i32>} : memref<16x128xbf16, #tpu.memory_space<vmem>>, vector<16x128xbf16>,
    return
  }
  func.func @transform_0(%arg0: i32) -> (i32, i32) {
    %c0_i32 = arith.constant 0 : i32
    %c0_i32_0 = arith.constant 0 : i32
    return %arg0, %c0_i32 : i32, i32
  }
  func.func @transform_1(%arg0: i32) -> (i32, i32) {
    %c0_i32 = arith.constant 0 : i32
    %c0_i32_0 = arith.constant 0 : i32
    return %arg0, %c0_i32 : i32, i32
  }
  func.func @transform_2(%arg0: i32) -> (i32, i32) {
    %c0_i32 = arith.constant 0 : i32
    %c0_i32_0 = arith.constant 0 : i32
    %c0_i32_1 = arith.constant 0 : i32
    return %c0_i32, %c0_i32_0 : i32, i32
  }
  func.func @transform_3(%arg0: i32) -> (i32, i32) {
    %c0_i32 = arith.constant 0 : i32
    %c0_i32_0 = arith.constant 0 : i32
    %c0_i32_1 = arith.constant 0 : i32
    return %c0_i32, %c0_i32_0 : i32, i32
  }
  func.func @transform_4(%arg0: i32) -> (i32, i32) {
    %c0_i32 = arith.constant 0 : i32
    %c0_i32_0 = arith.constant 0 : i32
    %c0_i32_1 = arith.constant 0 : i32
    return %c0_i32, %c0_i32_0 : i32, i32
  }
  func.func @transform_5(%arg0: i32) -> (i32, i32) {
    %c0_i32 = arith.constant 0 : i32
    %c0_i32_0 = arith.constant 0 : i32
    %c0_i32_1 = arith.constant 0 : i32
    return %c0_i32, %c0_i32_0 : i32, i32
  }
  func.func @transform_6(%arg0: i32) -> (i32, i32) {
    %c0_i32 = arith.constant 0 : i32
    %c0_i32_0 = arith.constant 0 : i32
    %c0_i32_1 = arith.constant 0 : i32
    return %c0_i32, %c0_i32_0 : i32, i32
  }
  func.func @transform_7(%arg0: i32) -> (i32, i32) {
    %c0_i32 = arith.constant 0 : i32
    %c0_i32_0 = arith.constant 0 : i32
    return %arg0, %c0_i32 : i32, i32
  }
}

</mosaic_0001>

<llo_original>
// kernel: tpu_custom_call.1
$region0: #{tpu_custom_call.1}
  #allocation0 [shape = 'u32[]', space=smem, size = 0x4, offset = 0x4, fixed_abs, tag = 'smem constant byte address 0x4 - core index']
  #allocation1 [shape = 'u32[144,128]{1,0:T(1,128)}', space=vmem, size = 0x12000, scoped, tag = 'internal scratch']
  %s0 = inlined_call_operand.hbm [shape: f32[16,32], index: 0, kind: input, shape index: {}]
  %s1 = inlined_call_operand.hbm [shape: f32[16,16], index: 1, kind: input, shape index: {}]
  %s2 = inlined_call_operand.hbm [shape: bf16[32,128], index: 2, kind: input, shape index: {}]
  %s3 = inlined_call_operand.vmem [shape: bf16[16,128], index: 3, kind: input, shape index: {}]
  %s4 = inlined_call_operand.vmem [shape: f32[1,128], index: 4, kind: input, shape index: {}]
  %s5 = inlined_call_operand.hbm [shape: bf16[128,128], index: 5, kind: input, shape index: {}]
  %s6 = inlined_call_operand.vmem [shape: f32[1,128], index: 6, kind: input, shape index: {}]
  %s7 = inlined_call_operand.hbm [shape: bf16[16,128], index: 7, kind: output, shape index: {}]
  %s8 = sld [smem:[#allocation0]]
  $region54: #{tpu_custom_call.1} parent=0
    _
  %s10 = ssub.s32 1, %s8
  %s11 = scalar_select 0, %s10, %s8
  $region1: #{tpu_custom_call.1} parent=0
    #allocation2 [shape = 'u8[8192]{0}', space=vmem, size = 0x2000, scoped, tag = 'input window, operand 0, single buffered']
    #allocation3 [shape = 's32[1]{0}', space=sflag, size = 0x4, scoped, tag = 'scoped memory for tpu_custom_call.1']
    #allocation4 [shape = 's32[1]{0}', space=sflag, size = 0x4, scoped, tag = 'scoped memory for tpu_custom_call.1']
    #allocation5 [shape = 'u8[8192]{0}', space=vmem, size = 0x2000, scoped, tag = 'input window, operand 1, single buffered']
    #allocation6 [shape = 's32[1]{0}', space=sflag, size = 0x4, scoped, tag = 'scoped memory for tpu_custom_call.1']
    #allocation7 [shape = 'u8[8192]{0}', space=vmem, size = 0x2000, scoped, tag = 'input window, operand 2, single buffered']
    #allocation8 [shape = 'u8[32768]{0}', space=vmem, size = 0x8000, scoped, tag = 'input window, operand 5, single buffered']
    #allocation9 [shape = 's32[1]{0}', space=sflag, size = 0x4, scoped, tag = 'scoped memory for tpu_custom_call.1']
    #allocation10 [shape = 'u8[4096]{0}', space=vmem, size = 0x1000, scoped, tag = 'output window, operand 0, single buffered']
    %12 = vsyncpa [#allocation3], 0
    %13 = vsyncpa [#allocation6], 0
    %14 = vsyncpa [#allocation9], 0
    %15 = vsyncpa [#allocation4], 0
    // Predicated region
    $region2: #{tpu_custom_call.1} parent=1 // pred_check
      _
    $region3: #{tpu_custom_call.1} parent=1 // pred_check_branch
      %17 = sbr.rel (0) target = $region5
    $region4: #{tpu_custom_call.1} parent=1 // pred_region
      %s19 = ssub.s32 256, 256
      %20 = vsyncadd [#allocation3], %s19
      %s21 = sshll.u32 [#allocation2], 4
      %s22 = int_to_ptr.vmem [resolvable:$true] %s21
      %27 = dma.hbm_to_vmem [thread:$0]  %s0, 256, %s22, [#allocation3], 128, 128, 8
    $region5: #{tpu_custom_call.1} parent=1 // pred_fallthru
      _
    // Predicated region
    $region6: #{tpu_custom_call.1} parent=1 // pred_check
      _
    $region7: #{tpu_custom_call.1} parent=1 // pred_check_branch
      %29 = sbr.rel (0) target = $region9
    $region8: #{tpu_custom_call.1} parent=1 // pred_region
      %s31 = ssub.s32 256, 256
      %32 = vsyncadd [#allocation6], %s31
      %s33 = sshll.u32 [#allocation5], 4
      %s34 = int_to_ptr.vmem [resolvable:$true] %s33
      %39 = dma.hbm_to_vmem [thread:$0]  %s1, 256, %s34, [#allocation6], 128, 128, 8
    $region9: #{tpu_custom_call.1} parent=1 // pred_fallthru
      _
    // Predicated region
    $region10: #{tpu_custom_call.1} parent=1 // pred_check
      _
    $region11: #{tpu_custom_call.1} parent=1 // pred_check_branch
      %41 = sbr.rel (0) target = $region13
    $region12: #{tpu_custom_call.1} parent=1 // pred_region
      %s43 = ssub.s32 256, 256
      %44 = vsyncadd [#allocation6], %s43
      %s45 = sshll.u32 [#allocation7], 4
      %s46 = int_to_ptr.vmem [resolvable:$true] %s45
      %51 = dma.hbm_to_vmem [thread:$0]  %s2, 256, %s46, [#allocation6], 64, 64, 4
    $region13: #{tpu_custom_call.1} parent=1 // pred_fallthru
      _
    // Predicated region
    $region14: #{tpu_custom_call.1} parent=1 // pred_check
      _
    $region15: #{tpu_custom_call.1} parent=1 // pred_check_branch
      %53 = sbr.rel (0) target = $region17
    $region16: #{tpu_custom_call.1} parent=1 // pred_region
      _
    $region17: #{tpu_custom_call.1} parent=1 // pred_fallthru
      _
    // Predicated region
    $region18: #{tpu_custom_call.1} parent=1 // pred_check
      _
    $region19: #{tpu_custom_call.1} parent=1 // pred_check_branch
      %55 = sbr.rel (0) target = $region21
    $region20: #{tpu_custom_call.1} parent=1 // pred_region
      _
    $region21: #{tpu_custom_call.1} parent=1 // pred_fallthru
      _
    // Predicated region
    $region22: #{tpu_custom_call.1} parent=1 // pred_check
      _
    $region23: #{tpu_custom_call.1} parent=1 // pred_check_branch
      %57 = sbr.rel (0) target = $region25
    $region24: #{tpu_custom_call.1} parent=1 // pred_region
      %s59 = ssub.s32 1024, 1024
      %60 = vsyncadd [#allocation9], %s59
      %s61 = sshll.u32 [#allocation8], 4
      %s62 = int_to_ptr.vmem [resolvable:$true] %s61
      %67 = dma.hbm_to_vmem [thread:$0]  %s5, 1024, %s62, [#allocation9], 64, 64, 4
    $region25: #{tpu_custom_call.1} parent=1 // pred_fallthru
      _
    // Predicated region
    $region26: #{tpu_custom_call.1} parent=1 // pred_check
      _
    $region27: #{tpu_custom_call.1} parent=1 // pred_check_branch
      %69 = sbr.rel (0) target = $region29
    $region28: #{tpu_custom_call.1} parent=1 // pred_region
      _
    $region29: #{tpu_custom_call.1} parent=1 // pred_fallthru
      _
    // Predicated region
    $region30: #{tpu_custom_call.1} parent=1 // pred_check
      _
    $region31: #{tpu_custom_call.1} parent=1 // pred_check_branch
      %71 = sbr.rel (0) target = $region33
    $region32: #{tpu_custom_call.1} parent=1 // pred_region
      %72 = dma.done [#allocation3], 256
    $region33: #{tpu_custom_call.1} parent=1 // pred_fallthru
      _
    // Predicated region
    $region34: #{tpu_custom_call.1} parent=1 // pred_check
      _
    $region35: #{tpu_custom_call.1} parent=1 // pred_check_branch
      %74 = sbr.rel (0) target = $region37
    $region36: #{tpu_custom_call.1} parent=1 // pred_region
      %75 = dma.done [#allocation6], 256
    $region37: #{tpu_custom_call.1} parent=1 // pred_fallthru
      _
    // Predicated region
    $region38: #{tpu_custom_call.1} parent=1 // pred_check
      _
    $region39: #{tpu_custom_call.1} parent=1 // pred_check_branch
      %77 = sbr.rel (0) target = $region41
    $region40: #{tpu_custom_call.1} parent=1 // pred_region
      %78 = dma.done [#allocation6], 256
    $region41: #{tpu_custom_call.1} parent=1 // pred_fallthru
      _
    // Predicated region
    $region42: #{tpu_custom_call.1} parent=1 // pred_check
      _
    $region43: #{tpu_custom_call.1} parent=1 // pred_check_branch
      %80 = sbr.rel (0) target = $region45
    $region44: #{tpu_custom_call.1} parent=1 // pred_region
      %81 = dma.done [#allocation9], 1024
    $region45: #{tpu_custom_call.1} parent=1 // pred_fallthru
      _
    %v83 = vld [vmem:[#allocation2] sm:$0xff]
    %v84 = vld [vmem:[#allocation2 + $0x8] sm:$0xff]
    %v85 = vpack.c.bf16 %v84, %v83
    %v86 = vld [vmem:[#allocation5] sm:$0xff]
    %v87 = vld [vmem:[#allocation5 + $0x8] sm:$0xff]
    %v88 = vpack.c.bf16 %v87, %v86
    %v89 = vld [vmem:[#allocation7] sm:$0xf]
    %v90 = vld [vmem:[#allocation7 + $0x4] sm:$0xf]
    %v91 = vld [vmem:[#allocation7 + $0x8] sm:$0xf]
    %v92 = vld [vmem:[#allocation7 + $0xc] sm:$0xf]
    %v93 = vld [vmem:[%s3] sm:$0xf]
    %v94 = vld [vmem:[%s3 + $0x4] sm:$0xf]
    %v97 = vunpack.c.l.b16 %v93
    %v98 = vunpack.c.l.b16 %v94
    %v99 = vpack.c.b16 %v98, %v97
    %vm101 = vcmask 130048
    %v103 = vsel %vm101, %v88, 0
    %105 = vmatprep.subr.bf16.mxu0 0
    %106 = vmatpush1.bf16.msra.mxu0 %v99
    %107 = vmatprep.subr.bf16.mxu0 0
    %108 = vmatpush1.bf16.msra.mxu0 0
    %109 = vmatprep.subr.bf16.mxu0 0
    %110 = vmatpush1.bf16.msra.mxu0 0
    %111 = vmatprep.subr.bf16.mxu0 0
    %112 = vmatpush1.bf16.msra.mxu0 0
    %113 = vmatprep.subr.bf16.mxu0 0
    %114 = vmatpush1.bf16.msra.mxu0 0
    %115 = vmatprep.subr.bf16.mxu0 0
    %116 = vmatpush1.bf16.msra.mxu0 0
    %117 = vmatprep.subr.bf16.mxu0 0
    %118 = vmatpush1.bf16.msra.mxu0 0
    %119 = vmatprep.subr.bf16.mxu0 0
    %120 = vmatpush1.bf16.msra.mxu0 0
    %121 = vmatprep.subr.bf16.mxu0 0
    %122 = vmatpush1.bf16.msra.mxu0 0
    %123 = vmatprep.subr.bf16.mxu0 0
    %124 = vmatpush1.bf16.msra.mxu0 0
    %125 = vmatprep.subr.bf16.mxu0 0
    %126 = vmatpush1.bf16.msra.mxu0 0
    %127 = vmatprep.subr.bf16.mxu0 0
    %128 = vmatpush1.bf16.msra.mxu0 0
    %129 = vmatprep.subr.bf16.mxu0 0
    %130 = vmatpush1.bf16.msra.mxu0 0
    %131 = vmatprep.subr.bf16.mxu0 0
    %132 = vmatpush1.bf16.msra.mxu0 0
    %133 = vmatprep.subr.bf16.mxu0 0
    %134 = vmatpush1.bf16.msra.mxu0 0
    %135 = vmatprep.subr.bf16.mxu0 0
    %136 = vmatpush1.bf16.msra.mxu0 0
    %137 = vmatprep.mubr.bf16.mxu0 0
    %138 = vmatmul.mubr.bf16.gmra.mrb[0].mxu0 %v103
    %v139 = vpop.f32.mrb[0].mxu0
    %v140 = vadd.f32 0.0, %v139
    %v141 = vpop.f32.mrb[0].mxu0
    %v142 = vpop.f32.mrb[0].mxu0
    %v143 = vadd.f32 0.0, %v142
    %v144 = vpop.f32.mrb[0].mxu0
    %145 = vdwg.mxu0
    %v150 = vunpack.c.l.b16 %v89
    %v151 = vunpack.c.l.b16 %v90
    %v152 = vunpack.c.l.b16 %v91
    %v153 = vunpack.c.l.b16 %v92
    %v154 = vpack.c.b16 %v151, %v150
    %v155 = vpack.c.b16 %v153, %v152
    %vm158 = vcmask 261120
    %v160 = vsel %vm158, %v85, 0
    %162 = vmatprep.subr.bf16.mxu0 0
    %163 = vmatpush1.bf16.msra.mxu0 %v154
    %164 = vmatprep.subr.bf16.mxu0 0
    %165 = vmatpush1.bf16.msra.mxu0 %v155
    %166 = vmatprep.subr.bf16.mxu0 0
    %167 = vmatpush1.bf16.msra.mxu0 0
    %168 = vmatprep.subr.bf16.mxu0 0
    %169 = vmatpush1.bf16.msra.mxu0 0
    %170 = vmatprep.subr.bf16.mxu0 0
    %171 = vmatpush1.bf16.msra.mxu0 0
    %172 = vmatprep.subr.bf16.mxu0 0
    %173 = vmatpush1.bf16.msra.mxu0 0
    %174 = vmatprep.subr.bf16.mxu0 0
    %175 = vmatpush1.bf16.msra.mxu0 0
    %176 = vmatprep.subr.bf16.mxu0 0
    %177 = vmatpush1.bf16.msra.mxu0 0
    %178 = vmatprep.subr.bf16.mxu0 0
    %179 = vmatpush1.bf16.msra.mxu0 0
    %180 = vmatprep.subr.bf16.mxu0 0
    %181 = vmatpush1.bf16.msra.mxu0 0
    %182 = vmatprep.subr.bf16.mxu0 0
    %183 = vmatpush1.bf16.msra.mxu0 0
    %184 = vmatprep.subr.bf16.mxu0 0
    %185 = vmatpush1.bf16.msra.mxu0 0
    %186 = vmatprep.subr.bf16.mxu0 0
    %187 = vmatpush1.bf16.msra.mxu0 0
    %188 = vmatprep.subr.bf16.mxu0 0
    %189 = vmatpush1.bf16.msra.mxu0 0
    %190 = vmatprep.subr.bf16.mxu0 0
    %191 = vmatpush1.bf16.msra.mxu0 0
    %192 = vmatprep.subr.bf16.mxu0 0
    %193 = vmatpush1.bf16.msra.mxu0 0
    %194 = vmatprep.mubr.bf16.mxu0 0
    %195 = vmatmul.mubr.bf16.gmra.mrb[0].mxu0 %v160
    %v196 = vpop.f32.mrb[0].mxu0
    %v197 = vadd.f32 %v140, %v196
    %v198 = vpop.f32.mrb[0].mxu0
    %v199 = vpop.f32.mrb[0].mxu0
    %v200 = vadd.f32 %v143, %v199
    %v201 = vpop.f32.mrb[0].mxu0
    %202 = vdwg.mxu0
    %v203 = vld [vmem:[%s4] sm:$0x1]
    %v205 = vlaneseq
    %v206 = vshrl.u32 %v205, 7
    %v207 = vsub.s32 0, %v206
    %v208 = vrot.slane %v203, %v207
    %v210 = vadd.f32 %v197, %v208
    %v211 = vadd.f32 %v200, %v208
    %v212 = vmax.f32 %v210, 0.0
    %v213 = vmax.f32 %v211, 0.0
    %v214 = vpack.c.bf16 %v213, %v212
    %v215 = vld [vmem:[#allocation8] sm:$0xf]
    %v216 = vld [vmem:[#allocation8 + $0x4] sm:$0xf]
    %v217 = vld [vmem:[#allocation8 + $0x8] sm:$0xf]
    %v218 = vld [vmem:[#allocation8 + $0xc] sm:$0xf]
    %v219 = vld [vmem:[#allocation8 + $0x10] sm:$0xf]
    %v220 = vld [vmem:[#allocation8 + $0x14] sm:$0xf]
    %v221 = vld [vmem:[#allocation8 + $0x18] sm:$0xf]
    %v222 = vld [vmem:[#allocation8 + $0x1c] sm:$0xf]
    %v223 = vld [vmem:[#allocation8 + $0x20] sm:$0xf]
    %v224 = vld [vmem:[#allocation8 + $0x24] sm:$0xf]
    %v225 = vld [vmem:[#allocation8 + $0x28] sm:$0xf]
    %v226 = vld [vmem:[#allocation8 + $0x2c] sm:$0xf]
    %v227 = vld [vmem:[#allocation8 + $0x30] sm:$0xf]
    %v228 = vld [vmem:[#allocation8 + $0x34] sm:$0xf]
    %v229 = vld [vmem:[#allocation8 + $0x38] sm:$0xf]
    %v230 = vld [vmem:[#allocation8 + $0x3c] sm:$0xf]
    %v231 = vld [vmem:[%s6] sm:$0x1]
    %v233 = vlaneseq
    %v234 = vshrl.u32 %v233, 7
    %v235 = vsub.s32 0, %v234
    %v236 = vrot.slane %v231, %v235
    %v254 = vunpack.c.l.b16 %v215
    %v255 = vunpack.c.l.b16 %v216
    %v256 = vunpack.c.l.b16 %v217
    %v257 = vunpack.c.l.b16 %v218
    %v258 = vunpack.c.l.b16 %v219
    %v259 = vunpack.c.l.b16 %v220
    %v260 = vunpack.c.l.b16 %v221
    %v261 = vunpack.c.l.b16 %v222
    %v262 = vunpack.c.l.b16 %v223
    %v263 = vunpack.c.l.b16 %v224
    %v264 = vunpack.c.l.b16 %v225
    %v265 = vunpack.c.l.b16 %v226
    %v266 = vunpack.c.l.b16 %v227
    %v267 = vunpack.c.l.b16 %v228
    %v268 = vunpack.c.l.b16 %v229
    %v269 = vunpack.c.l.b16 %v230
    %v270 = vpack.c.b16 %v255, %v254
    %v271 = vpack.c.b16 %v257, %v256
    %v272 = vpack.c.b16 %v259, %v258
    %v273 = vpack.c.b16 %v261, %v260
    %v274 = vpack.c.b16 %v263, %v262
    %v275 = vpack.c.b16 %v265, %v264
    %v276 = vpack.c.b16 %v267, %v266
    %v277 = vpack.c.b16 %v269, %v268
    %286 = vmatprep.subr.bf16.mxu0 0
    %287 = vmatpush1.bf16.msra.mxu0 %v270
    %288 = vmatprep.subr.bf16.mxu0 0
    %289 = vmatpush1.bf16.msra.mxu0 %v271
    %290 = vmatprep.subr.bf16.mxu0 0
    %291 = vmatpush1.bf16.msra.mxu0 %v272
    %292 = vmatprep.subr.bf16.mxu0 0
    %293 = vmatpush1.bf16.msra.mxu0 %v273
    %294 = vmatprep.subr.bf16.mxu0 0
    %295 = vmatpush1.bf16.msra.mxu0 %v274
    %296 = vmatprep.subr.bf16.mxu0 0
    %297 = vmatpush1.bf16.msra.mxu0 %v275
    %298 = vmatprep.subr.bf16.mxu0 0
    %299 = vmatpush1.bf16.msra.mxu0 %v276
    %300 = vmatprep.subr.bf16.mxu0 0
    %301 = vmatpush1.bf16.msra.mxu0 %v277
    %302 = vmatprep.subr.bf16.mxu0 0
    %303 = vmatpush1.bf16.msra.mxu0 0
    %304 = vmatprep.subr.bf16.mxu0 0
    %305 = vmatpush1.bf16.msra.mxu0 0
    %306 = vmatprep.subr.bf16.mxu0 0
    %307 = vmatpush1.bf16.msra.mxu0 0
    %308 = vmatprep.subr.bf16.mxu0 0
    %309 = vmatpush1.bf16.msra.mxu0 0
    %310 = vmatprep.subr.bf16.mxu0 0
    %311 = vmatpush1.bf16.msra.mxu0 0
    %312 = vmatprep.subr.bf16.mxu0 0
    %313 = vmatpush1.bf16.msra.mxu0 0
    %314 = vmatprep.subr.bf16.mxu0 0
    %315 = vmatpush1.bf16.msra.mxu0 0
    %316 = vmatprep.subr.bf16.mxu0 0
    %317 = vmatpush1.bf16.msra.mxu0 0
    %318 = vmatprep.mubr.bf16.mxu0 0
    %319 = vmatmul.mubr.bf16.gmra.mrb[0].mxu0 %v214
    %v320 = vpop.f32.mrb[0].mxu0
    %v321 = vadd.f32 %v236, %v320
    %v322 = vpop.f32.mrb[0].mxu0
    %v323 = vpop.f32.mrb[0].mxu0
    %v324 = vadd.f32 %v236, %v323
    %v325 = vpop.f32.mrb[0].mxu0
    %326 = vdwg.mxu0
    %v327 = vpack.c.bf16 %v324, %v321
    %v329 = vunpack.c.l.b16 %v327
    %v330 = vunpack.c.h.b16 %v327
    %v331 = vpack.c.b16 %v329, %v329
    %v332 = vpack.c.b16 %v330, %v330
    %335 = vst [vmem:[#allocation10] sm:$0xf] %v331
    %336 = vst [vmem:[#allocation10 + $0x4] sm:$0xf] %v332
    // Predicated region
    $region46: #{tpu_custom_call.1} parent=1 // pred_check
      _
    $region47: #{tpu_custom_call.1} parent=1 // pred_check_branch
      %338 = sbr.rel (0) target = $region49
    $region48: #{tpu_custom_call.1} parent=1 // pred_region
      %s340 = ssub.s32 128, 128
      %341 = vsyncadd [#allocation4], %s340
      %s342 = sshll.u32 [#allocation10], 4
      %s343 = int_to_ptr.vmem [resolvable:$true] %s342
      %348 = dma.vmem_to_hbm [thread:$0]  %s343, 128, %s7, [#allocation4], 64, 64, 4
    $region49: #{tpu_custom_call.1} parent=1 // pred_fallthru
      _
    // Predicated region
    $region50: #{tpu_custom_call.1} parent=1 // pred_check
      _
    $region51: #{tpu_custom_call.1} parent=1 // pred_check_branch
      %350 = sbr.rel (0) target = $region53
    $region52: #{tpu_custom_call.1} parent=1 // pred_region
      %351 = dma.done [#allocation4], 128
    $region53: #{tpu_custom_call.1} parent=1 // pred_fallthru
      _
    %352 = vsyncpa [#allocation3], 1
    %353 = vsyncpa [#allocation6], 1
    %354 = vsyncpa [#allocation9], 1
    %355 = vsyncpa [#allocation4], 1

</llo_original>
